<compile_context>
chip_gen: v5e
topology: v5e:2x2
jax: 0.10.0
libtpu: 0.0.40
codegen_flags: <defaults>
</compile_context>

<pallas_src>
import functools
import math

import jax
import jax.numpy as jnp
from jax import lax
from jax.experimental import pallas as pl
from jax.experimental.pallas import tpu as pltpu

ALPHA = 0.25
GAMMA = 3.0

_LANES = 128
_MAX_BLOCK_COLS = 2048
_TARGET_TILE_BYTES = 4 * 1024 * 1024     # ~4 MiB per operand per pipeline buffer
_VMEM_LIMIT_BYTES = 32 * 1024 * 1024     # 'none': 3 ops x 2 bufs x 4 MiB = 24 MiB


# --------------------------------------------------------------------------- #
# Elementwise math
# --------------------------------------------------------------------------- #
def _static_pow(base, gamma):
    """base ** gamma with the exponent resolved at trace time."""
    g = float(gamma)
    if g == 0.0:
        return jnp.ones_like(base)
    if g.is_integer() and 1.0 <= g <= 8.0:
        out = base
        for _ in range(int(g) - 1):
            out = out * base
        return out
    # Non-integer exponent lowers to exp(g*log(.)): clamp so a ~1-ulp negative
    # base (from the approximate reciprocal) cannot produce NaN.
    return jnp.power(jnp.maximum(base, 0.0), g)


def _focal_elementwise(x, t, alpha, gamma, binary_targets):
    x = x.astype(jnp.float32)
    t = t.astype(jnp.float32)
    e = jnp.exp(-jnp.abs(x))                 # single heavy exp per element (EUP)
    softplus = jnp.log1p(e)
    if binary_targets:
        # For t in {0,1}:  max(x,0) - x*t == relu((1-2t)*x)   (saves a VPU sub)
        z = (1.0 - 2.0 * t) * x
        bce = jnp.maximum(z, 0.0) + softplus
        # pt = exp(-bce) = {1 or e} / (1 + e); numerator is 1 exactly when z<=0,
        # so no second exp is needed.
        denom = 1.0 + e
        r = pl.reciprocal(denom, approx=True)
        r = r * (2.0 - denom * r)            # one Newton step -> ~f32 precision
        pt = r * jnp.where(z <= 0.0, 1.0, e)
    else:
        # Soft targets: keep the exact stable BCE and exp(-BCE).
        bce = jnp.maximum(x, 0.0) - x * t + softplus
        pt = jnp.exp(-bce)
    focal_w = _static_pow(1.0 - pt, gamma)
    return alpha * focal_w * bce


# --------------------------------------------------------------------------- #
# Kernels
# --------------------------------------------------------------------------- #
def _focal_none_kernel(x_ref, t_ref, o_ref, *, alpha, gamma, binary_targets):
    o_ref[...] = _focal_elementwise(
        x_ref[...], t_ref[...], alpha, gamma, binary_targets
    ).astype(o_ref.dtype)


def _focal_partial_sum_kernel(x_ref, t_ref, ps_ref, *, alpha, gamma,
                              binary_targets, block_rows, block_cols,
                              valid_rows, valid_cols, needs_mask):
    loss = _focal_elementwise(x_ref[...], t_ref[...], alpha, gamma,
                              binary_targets)

    def _store(v):
        # per-column partial sums -> (1, 1, block_cols), lane-dense store
        ps_ref[...] = jnp.sum(v, axis=0, keepdims=True)[None]

    if not needs_mask:                       # grid divides evenly: never mask
        _store(loss)
        return

    i = pl.program_id(0)
    j = pl.program_id(1)
    is_edge = jnp.logical_or(i == pl.num_programs(0) - 1,
                             j == pl.num_programs(1) - 1)

    @pl.when(jnp.logical_not(is_edge))
    def _():                                 # interior tiles: zero masking cost
        _store(loss)

    @pl.when(is_edge)
    def _():                                 # edge tiles only: mask ragged tail
        row_ids = i * block_rows + lax.broadcasted_iota(
            jnp.int32, (block_rows, 1), 0)
        col_ids = j * block_cols + lax.broadcasted_iota(
            jnp.int32, (1, block_cols), 1)
        keep = jnp.logical_and(row_ids < valid_rows, col_ids < valid_cols)
        _store(jnp.where(keep, loss, 0.0))   # where (not mul) so OOB NaN is safe


# --------------------------------------------------------------------------- #
# Tiling helpers
# --------------------------------------------------------------------------- #
def _sublane_multiple(*dtypes):
    min_bytes = min(jnp.dtype(d).itemsize for d in dtypes)
    return max(8, 32 // min_bytes)           # f32: 8, bf16: 16, 8-bit: 32


def _choose_block_rows(rows, block_cols, itemsize, sub):
    padded_cols = pl.cdiv(block_cols, _LANES) * _LANES   # account lane padding
    target = _TARGET_TILE_BYTES // (padded_cols * itemsize)
    target = max(sub, (target // sub) * sub)
    return rows if rows <= target else target


# --------------------------------------------------------------------------- #
# Public wrapper
# --------------------------------------------------------------------------- #
def focal_loss(inputs, targets, reduction="none", *, alpha=ALPHA, gamma=GAMMA,
               binary_targets=True, block_rows=None, block_cols=None):
    """Pallas TPU implementation of FocalLoss.forward.

    inputs/targets: same-shaped arrays (logits, targets).  binary_targets=True
    assumes targets are exactly {0,1} (fast single-exp pt path); pass
    binary_targets=False for soft / label-smoothed targets.
    block_rows/block_cols override the auto tile choice (testing/tuning only).
    """
    assert inputs.shape == targets.shape, "inputs/targets shape mismatch"
    orig_shape = inputs.shape
    out_dtype = inputs.dtype
    n_valid = math.prod(orig_shape) if orig_shape else 1

    if n_valid == 0:
        if reduction == "sum":
            return jnp.zeros((), out_dtype)
        if reduction == "mean":
            return jnp.full((), jnp.nan, out_dtype)
        return jnp.zeros(orig_shape, out_dtype)

    # ---- 2-D lane-friendly view: reshapes only, never pad / slice ----------
    if len(orig_shape) >= 2 and orig_shape[-1] >= _LANES:
        cols = orig_shape[-1]                 # keep original (possibly ragged)
    elif n_valid % _LANES == 0 and n_valid >= _LANES:
        cols = _LANES                          # narrow classes: lane-dense slab
    else:
        cols = n_valid                         # tiny / odd sizes: one flat row
    rows = n_valid // cols
    x2 = inputs.reshape(rows, cols)
    t2 = targets.reshape(rows, cols)

    itemsize = max(jnp.dtype(inputs.dtype).itemsize,
                   jnp.dtype(targets.dtype).itemsize,
                   jnp.dtype(out_dtype).itemsize)
    sub = _sublane_multiple(inputs.dtype, targets.dtype, out_dtype)

    if block_cols is None:
        # Full dim (always layout-legal) when it fits, else a 128-multiple tile
        # with a ragged last block handled in-kernel.
        block_cols = min(cols, _MAX_BLOCK_COLS)
    if block_rows is None:
        block_rows = _choose_block_rows(rows, block_cols, itemsize, sub)

    grid_r = pl.cdiv(rows, block_rows)
    grid_c = pl.cdiv(cols, block_cols)
    grid = (grid_r, grid_c)

    io_spec = pl.BlockSpec((block_rows, block_cols), lambda i, j: (i, j))
    cparams = pltpu.CompilerParams(
        dimension_semantics=("parallel", "parallel"),   # v7x: 2 TCs share grid
        vmem_limit_bytes=_VMEM_LIMIT_BYTES)

    x_bytes = jnp.dtype(inputs.dtype).itemsize
    t_bytes = jnp.dtype(targets.dtype).itemsize
    o_bytes = jnp.dtype(out_dtype).itemsize
    n_elems = rows * cols

    if reduction in ("mean", "sum"):
        needs_mask = (rows % block_rows != 0) or (cols % block_cols != 0)
        kernel = functools.partial(
            _focal_partial_sum_kernel, alpha=float(alpha), gamma=float(gamma),
            binary_targets=binary_targets, block_rows=block_rows,
            block_cols=block_cols, valid_rows=rows, valid_cols=cols,
            needs_mask=needs_mask)
        partials = pl.pallas_call(
            kernel,
            out_shape=jax.ShapeDtypeStruct((grid_r * grid_c, 1, block_cols),
                                           jnp.float32),
            grid_spec=pltpu.PrefetchScalarGridSpec(
                num_scalar_prefetch=0,
                grid=grid,
                in_specs=[io_spec, io_spec],
                out_specs=pl.BlockSpec((1, 1, block_cols),
                                       lambda i, j: (i * grid_c + j, 0, 0)),
            ),
            compiler_params=cparams,
            cost_estimate=pl.CostEstimate(
                flops=20 * n_elems,
                transcendentals=3 * n_elems,
                bytes_accessed=(x_bytes + t_bytes) * n_elems
                               + 4 * grid_r * grid_c * block_cols),
        )(x2, t2)
        total = jnp.sum(partials)              # tiny follow-up reduce
        if reduction == "mean":
            total = total / n_valid
        return total.astype(out_dtype)

    # reduction == 'none' (module default)
    kernel = functools.partial(
        _focal_none_kernel, alpha=float(alpha), gamma=float(gamma),
        binary_targets=binary_targets)
    out2 = pl.pallas_call(
        kernel,
        out_shape=jax.ShapeDtypeStruct((rows, cols), out_dtype),
        grid_spec=pltpu.PrefetchScalarGridSpec(
            num_scalar_prefetch=0,
            grid=grid,
            in_specs=[io_spec, io_spec],
            out_specs=io_spec,
        ),
        compiler_params=cparams,
        cost_estimate=pl.CostEstimate(
            flops=20 * n_elems,
            transcendentals=3 * n_elems,
            bytes_accessed=(x_bytes + t_bytes + o_bytes) * n_elems),
    )(x2, t2)
    return out2.reshape(orig_shape)            # free: inverse of collapse view


# --------------------------------------------------------------------------- #
# Reference + tests
# --------------------------------------------------------------------------- #
def _reference_focal_loss(inputs, targets, alpha=ALPHA, gamma=GAMMA):
    x = inputs.astype(jnp.float32)
    t = targets.astype(jnp.float32)
    bce = jnp.maximum(x, 0.0) - x * t + jnp.log1p(jnp.exp(-jnp.abs(x)))
    pt = jnp.exp(-bce)
    return alpha * (1.0 - pt) ** gamma * bce


if __name__ == "__main__":
    key = jax.random.PRNGKey(0)
    k = jax.random.split(key, 10)

    # 1) Narrow, unaligned shape: flat-row view, ragged last column block
    #    (edge-gated mask for sum/mean, partial writes for 'none'); no padding.
    N, C = 37, 100
    logits = jax.random.normal(k[0], (N, C), dtype=jnp.float32) * 2.0
    targets = (jax.random.uniform(k[1], (N, C)) > 0.5).astype(jnp.float32)
    ref = _reference_focal_loss(logits, targets)
    out_none = jax.block_until_ready(focal_loss(logits, targets, reduction="none"))
    assert out_none.shape == (N, C)
    assert jnp.allclose(out_none, ref, atol=1e-5, rtol=1e-4), "none mismatch"
    out_sum = jax.block_until_ready(focal_loss(logits, targets, reduction="sum"))
    assert jnp.allclose(out_sum, jnp.sum(ref), rtol=1e-4, atol=1e-4), "sum mismatch"
    out_mean = jax.block_until_ready(focal_loss(logits, targets, reduction="mean"))
    assert jnp.allclose(out_mean, jnp.mean(ref), rtol=1e-4, atol=1e-6), "mean mismatch"

    # 2) Last dim >= 128 but not a multiple of 128: full-dim column block, no copies.
    N2, C2 = 24, 200
    logits2 = jax.random.normal(k[2], (N2, C2), dtype=jnp.float32) * 2.0
    targets2 = (jax.random.uniform(k[3], (N2, C2)) > 0.5).astype(jnp.float32)
    ref2 = _reference_focal_loss(logits2, targets2)
    out2_none = jax.block_until_ready(focal_loss(logits2, targets2, reduction="none"))
    out2_sum = jax.block_until_ready(focal_loss(logits2, targets2, reduction="sum"))
    assert jnp.allclose(out2_none, ref2, atol=1e-5, rtol=1e-4), "ragged-col none mismatch"
    assert jnp.allclose(out2_sum, jnp.sum(ref2), rtol=1e-4, atol=1e-4), "ragged-col sum mismatch"

    # 3) Lane-aligned shape + soft (non-binary) targets path.
    N3, C3 = 8, 256
    logits3 = jax.random.normal(k[4], (N3, C3), dtype=jnp.float32) * 2.0
    soft_t = jax.random.uniform(k[5], (N3, C3), dtype=jnp.float32)
    ref3 = _reference_focal_loss(logits3, soft_t)
    out3 = jax.block_until_ready(
        focal_loss(logits3, soft_t, reduction="none", binary_targets=False))
    assert jnp.allclose(out3, ref3, atol=1e-5, rtol=1e-4), "soft-target mismatch"

    # 4) Multi-block grid with a partial row block: interior tiles take the
    #    unmasked pl.when branch, edge tiles the masked one.
    N4, C4 = 24, 256
    logits4 = jax.random.normal(k[6], (N4, C4), dtype=jnp.float32) * 2.0
    targets4 = (jax.random.uniform(k[7], (N4, C4)) > 0.5).astype(jnp.float32)
    ref4 = _reference_focal_loss(logits4, targets4)
    out4_none = jax.block_until_ready(
        focal_loss(logits4, targets4, reduction="none", block_rows=16, block_cols=128))
    out4_sum = jax.block_until_ready(
        focal_loss(logits4, targets4, reduction="sum", block_rows=16, block_cols=128))
    assert jnp.allclose(out4_none, ref4, atol=1e-5, rtol=1e-4), "blocked none mismatch"
    assert jnp.allclose(out4_sum, jnp.sum(ref4), rtol=1e-4, atol=1e-4), "blocked sum mismatch"

    # 5) (batch, 1) binary-classification logits: lane-dense flat view, no copies.
    B = 256
    logits5 = jax.random.normal(k[8], (B, 1), dtype=jnp.float32) * 2.0
    targets5 = (jax.random.uniform(k[9], (B, 1)) > 0.5).astype(jnp.float32)
    ref5 = _reference_focal_loss(logits5, targets5)
    out5_none = jax.block_until_ready(focal_loss(logits5, targets5, reduction="none"))
    out5_mean = jax.block_until_ready(focal_loss(logits5, targets5, reduction="mean"))
    assert out5_none.shape == (B, 1)
    assert jnp.allclose(out5_none, ref5, atol=1e-5, rtol=1e-4), "(B,1) none mismatch"
    assert jnp.allclose(out5_mean, jnp.mean(ref5), rtol=1e-4, atol=1e-6), "(B,1) mean mismatch"

    print("KERNEL_OK")
</pallas_src>

<mosaic_0001>
module attributes {stable_mosaic.version = 11 : i64} {
  func.func @_focal_none_kernel(%arg0: i32, %arg1: i32, %arg2: memref<1x2048xf32, #tpu.memory_space<vmem>>, %arg3: memref<1x2048xf32, #tpu.memory_space<vmem>>, %arg4: memref<1x2048xf32, #tpu.memory_space<vmem>>) attributes {dimension_semantics = [#tpu.dimension_semantics<parallel>, #tpu.dimension_semantics<parallel>], iteration_bounds = array<i64: 1, 2>, scalar_prefetch = 0 : i64, scratch_operands = 0 : i64, tpu.core_type = #tpu.core_type<tc>, window_params = [{transform_indices = @transform_0, window_bounds = array<i64: 1, 2048>}, {transform_indices = @transform_1, window_bounds = array<i64: 1, 2048>}, {transform_indices = @transform_2, window_bounds = array<i64: 1, 2048>}]} {
    %c0 = arith.constant 0 : index
    %c0_0 = arith.constant 0 : index
    %0 = vector.load %arg2[%c0, %c0_0] : memref<1x2048xf32, #tpu.memory_space<vmem>>, vector<1x2048xf32>
    %c0_1 = arith.constant 0 : index
    %c0_2 = arith.constant 0 : index
    %1 = vector.load %arg3[%c0_1, %c0_2] : memref<1x2048xf32, #tpu.memory_space<vmem>>, vector<1x2048xf32>
    %2 = math.absf %0 : vector<1x2048xf32>
    %cst = arith.constant 0.000000e+00 : f32
    %3 = vector.broadcast %cst : f32 to vector<1x2048xf32>
    %4 = arith.subf %3, %2 : vector<1x2048xf32>
    %5 = math.exp %4 : vector<1x2048xf32>
    %6 = math.log1p %5 : vector<1x2048xf32>
    %cst_3 = arith.constant 2.000000e+00 : f32
    %7 = vector.broadcast %cst_3 : f32 to vector<1x2048xf32>
    %8 = arith.mulf %7, %1 : vector<1x2048xf32>
    %cst_4 = arith.constant 1.000000e+00 : f32
    %9 = vector.broadcast %cst_4 : f32 to vector<1x2048xf32>
    %10 = arith.subf %9, %8 : vector<1x2048xf32>
    %11 = arith.mulf %10, %0 : vector<1x2048xf32>
    %cst_5 = arith.constant 0.000000e+00 : f32
    %12 = vector.broadcast %cst_5 : f32 to vector<1x2048xf32>
    %13 = arith.maximumf %11, %12 : vector<1x2048xf32>
    %14 = arith.addf %13, %6 : vector<1x2048xf32>
    %cst_6 = arith.constant 1.000000e+00 : f32
    %15 = vector.broadcast %cst_6 : f32 to vector<1x2048xf32>
    %16 = arith.addf %15, %5 : vector<1x2048xf32>
    %17 = tpu.reciprocal %16 {approx = true} : vector<1x2048xf32> -> vector<1x2048xf32>
    %18 = arith.mulf %16, %17 : vector<1x2048xf32>
    %cst_7 = arith.constant 2.000000e+00 : f32
    %19 = vector.broadcast %cst_7 : f32 to vector<1x2048xf32>
    %20 = arith.subf %19, %18 : vector<1x2048xf32>
    %21 = arith.mulf %17, %20 : vector<1x2048xf32>
    %cst_8 = arith.constant 0.000000e+00 : f32
    %22 = vector.broadcast %cst_8 : f32 to vector<1x2048xf32>
    %23 = arith.cmpf ole, %11, %22 : vector<1x2048xf32>
    %cst_9 = arith.constant 1.000000e+00 : f32
    %24 = vector.broadcast %cst_9 : f32 to vector<1x2048xf32>
    %25 = arith.select %23, %24, %5 : vector<1x2048xi1>, vector<1x2048xf32>
    %26 = arith.mulf %21, %25 : vector<1x2048xf32>
    %cst_10 = arith.constant 1.000000e+00 : f32
    %27 = vector.broadcast %cst_10 : f32 to vector<1x2048xf32>
    %28 = arith.subf %27, %26 : vector<1x2048xf32>
    %29 = arith.mulf %28, %28 : vector<1x2048xf32>
    %30 = arith.mulf %29, %28 : vector<1x2048xf32>
    %cst_11 = arith.constant 2.500000e-01 : f32
    %31 = vector.broadcast %cst_11 : f32 to vector<1x2048xf32>
    %32 = arith.mulf %31, %30 : vector<1x2048xf32>
    %33 = arith.mulf %32, %14 : vector<1x2048xf32>
    %c0_12 = arith.constant 0 : index
    %c0_13 = arith.constant 0 : index
    %34 = vector.load %arg4[%c0_12, %c0_13] : memref<1x2048xf32, #tpu.memory_space<vmem>>, vector<1x2048xf32>
    tpu.vector_store %arg4[%c0_12, %c0_13], %33 {strides = array<i32>} : memref<1x2048xf32, #tpu.memory_space<vmem>>, vector<1x2048xf32>,
    return
  }
  func.func @transform_0(%arg0: i32, %arg1: i32) -> (i32, i32) {
    %c0_i32 = arith.constant 0 : i32
    return %arg0, %arg1 : i32, i32
  }
  func.func @transform_1(%arg0: i32, %arg1: i32) -> (i32, i32) {
    %c0_i32 = arith.constant 0 : i32
    return %arg0, %arg1 : i32, i32
  }
  func.func @transform_2(%arg0: i32, %arg1: i32) -> (i32, i32) {
    %c0_i32 = arith.constant 0 : i32
    return %arg0, %arg1 : i32, i32
  }
}

</mosaic_0001>

<llo_original>
// kernel: tpu_custom_call.1
$region0: #{tpu_custom_call.1}
  #allocation0 [shape = 'u32[]', space=smem, size = 0x4, offset = 0x4, fixed_abs, tag = 'smem constant byte address 0x4 - core index']
  #allocation1 [shape = 'u32[72,128]{1,0:T(1,128)}', space=vmem, size = 0x9000, scoped, tag = 'internal scratch']
  %s0 = inlined_call_operand.hbm [shape: f32[1,3700], index: 0, kind: input, shape index: {}]
  %s1 = inlined_call_operand.hbm [shape: f32[1,3700], index: 1, kind: input, shape index: {}]
  %s2 = inlined_call_operand.hbm [shape: f32[1,3700], index: 2, kind: output, shape index: {}]
  %s3 = sld [smem:[#allocation0]]
  $region49: #{tpu_custom_call.1} parent=0
    _
  %s5 = ssub.s32 1, %s3
  %s6 = scalar_select 0, %s5, %s3
  $region1: #{tpu_custom_call.1} parent=0
    #allocation2 [shape = 'u8[16384]{0}', space=vmem, size = 0x4000, scoped, tag = 'input window, operand 0']
    #allocation3 [shape = 's32[2]{0}', space=sflag, size = 0x8, scoped, tag = 'scoped memory for tpu_custom_call.1']
    #allocation4 [shape = 's32[2]{0}', space=sflag, size = 0x8, scoped, tag = 'scoped memory for tpu_custom_call.1']
    #allocation5 [shape = 'u8[16384]{0}', space=vmem, size = 0x4000, scoped, tag = 'input window, operand 1']
    #allocation6 [shape = 's32[2]{0}', space=sflag, size = 0x8, scoped, tag = 'scoped memory for tpu_custom_call.1']
    #allocation7 [shape = 'u8[16384]{0}', space=vmem, size = 0x4000, scoped, tag = 'output window, operand 0']
    %7 = vsyncpa [#allocation3], 0
    %s8 = scalar_lea.sflag [#allocation3], 1
    %9 = vsyncpa %s8, 0
    %10 = vsyncpa [#allocation6], 0
    %s11 = scalar_lea.sflag [#allocation6], 1
    %12 = vsyncpa %s11, 0
    %13 = vsyncpa [#allocation4], 0
    %s14 = scalar_lea.sflag [#allocation4], 1
    %15 = vsyncpa %s14, 0
    loop: start=0, step=1, limit=4
    $region2: #{tpu_custom_call.1} parent=1 // loop_pre_header
      _
    $region3: #{tpu_custom_call.1} parent=1 // loop_header
      %s17 = sphi 0, %s21
      %p18 = scmp.ge.s32.totalorder %s17, 4
      %s24 = sphi 0, %s36
      %s25 = sphi 0, %s32
      %s26 = sphi 0, %s24
      %s27 = sphi 0, %s25
      %s28 = sphi 0, %s26
      %s29 = sphi 0, %s27
      %s41 = sphi 0, %s43
      %s44 = sphi 0, %s41
      %s45 = sphi 0, %s44
      %s61 = sphi 0, %s45
      %s69 = sphi 0, %s71
      %s72 = sphi 0, %s69
      %s73 = sphi 0, %s72
      %s89 = sphi 0, %s73
      %s97 = sphi 0, %s99
      %s100 = sphi 0, %s97
      %s101 = sphi 0, %s100
      %s117 = sphi 0, %s101
    $region4: #{tpu_custom_call.1} parent=1 // loop_header_branch
      %20 = sbr.rel (%p18) target = $region8
    $region5: #{tpu_custom_call.1} parent=1 // loop_body
      %s22 = ssub.s32 %s17, 1
      %s23 = ssub.s32 %s17, 2
      %s30 = sadd.s32 1, %s25
      %p31 = scmp.ge.s32.totalorder %s30, 2
      %s32 = scalar_select %p31, 0, %s30
      %s33 = sadd.s32 1, %s24
      %s34 = scalar_select %p31, %s33, %s24
      %p35 = scmp.ge.s32.totalorder %s34, 1
      %s36 = scalar_select %p35, 0, %s34
      %s37 = ssub.s32 %s24, %s36
      %s38 = ssub.s32 %s25, %s32
      %s39 = sor.u32 %s37, %s38
      %p40 = scmp.eq.s32.totalorder %s39, 0
      %s42 = sadd.s32 %s41, 1
      %s43 = scalar_select %p40, %s41, %s42
      %p46 = pneg %p40
      %p47 = scmp.eq.s32.totalorder %s17, 1
      %p48 = por %p46, %p47
      %p49 = scmp.ne.s32.totalorder %s41, %s44
      %p50 = scmp.eq.s32.totalorder %s17, 0
      %p51 = por %p49, %p50
      %p52 = scmp.ne.s32.totalorder %s41, %s44
      %p53 = scmp.eq.s32.totalorder %s22, 1
      %p54 = por %p52, %p53
      %p55 = scmp.ne.s32.totalorder %s44, %s45
      %p56 = scmp.eq.s32.totalorder %s22, 0
      %p57 = por %p55, %p56
      %p58 = scmp.ne.s32.totalorder %s44, %s45
      %p59 = scmp.eq.s32.totalorder %s23, 1
      %p60 = por %p58, %p59
      %p62 = scmp.ne.s32.totalorder %s45, %s61
      %p63 = scmp.eq.s32.totalorder %s23, 0
      %p64 = por %p62, %p63
      %s65 = ssub.s32 %s24, %s36
      %s66 = ssub.s32 %s25, %s32
      %s67 = sor.u32 %s65, %s66
      %p68 = scmp.eq.s32.totalorder %s67, 0
      %s70 = sadd.s32 %s69, 1
      %s71 = scalar_select %p68, %s69, %s70
      %p74 = pneg %p68
      %p75 = scmp.eq.s32.totalorder %s17, 1
      %p76 = por %p74, %p75
      %p77 = scmp.ne.s32.totalorder %s69, %s72
      %p78 = scmp.eq.s32.totalorder %s17, 0
      %p79 = por %p77, %p78
      %p80 = scmp.ne.s32.totalorder %s69, %s72
      %p81 = scmp.eq.s32.totalorder %s22, 1
      %p82 = por %p80, %p81
      %p83 = scmp.ne.s32.totalorder %s72, %s73
      %p84 = scmp.eq.s32.totalorder %s22, 0
      %p85 = por %p83, %p84
      %p86 = scmp.ne.s32.totalorder %s72, %s73
      %p87 = scmp.eq.s32.totalorder %s23, 1
      %p88 = por %p86, %p87
      %p90 = scmp.ne.s32.totalorder %s73, %s89
      %p91 = scmp.eq.s32.totalorder %s23, 0
      %p92 = por %p90, %p91
      %s93 = ssub.s32 %s24, %s36
      %s94 = ssub.s32 %s25, %s32
      %s95 = sor.u32 %s93, %s94
      %p96 = scmp.eq.s32.totalorder %s95, 0
      %s98 = sadd.s32 %s97, 1
      %s99 = scalar_select %p96, %s97, %s98
      %p102 = pneg %p96
      %p103 = scmp.eq.s32.totalorder %s17, 1
      %p104 = por %p102, %p103
      %p105 = scmp.ne.s32.totalorder %s97, %s100
      %p106 = scmp.eq.s32.totalorder %s17, 0
      %p107 = por %p105, %p106
      %p108 = scmp.ne.s32.totalorder %s97, %s100
      %p109 = scmp.eq.s32.totalorder %s22, 1
      %p110 = por %p108, %p109
      %p111 = scmp.ne.s32.totalorder %s100, %s101
      %p112 = scmp.eq.s32.totalorder %s22, 0
      %p113 = por %p111, %p112
      %p114 = scmp.ne.s32.totalorder %s100, %s101
      %p115 = scmp.eq.s32.totalorder %s23, 1
      %p116 = por %p114, %p115
      %p118 = scmp.ne.s32.totalorder %s101, %s117
      %p119 = scmp.eq.s32.totalorder %s23, 0
      %p120 = por %p118, %p119
      %p121 = scmp.le.s32.totalorder 1, %s17
      %p122 = scmp.lt.s32.totalorder %s17, 3
      %p123 = pnand %p121, %p122
      %p124 = pneg %p123
      // Predicated region
      $region9: #{tpu_custom_call.1} parent=5 // pred_check
        _
      $region10: #{tpu_custom_call.1} parent=5 // pred_check_branch
        %126 = sbr.rel (%p123) target = $region12
      $region11: #{tpu_custom_call.1} parent=5 // pred_region
        %s127 = ssub.s32 %s17, 1
      $region12: #{tpu_custom_call.1} parent=5 // pred_fallthru
        _
      %p128 = scmp.lt.s32.totalorder %s17, 2
      // Predicated region
      $region13: #{tpu_custom_call.1} parent=5 // pred_check
        %p129 = pneg %p128
      $region14: #{tpu_custom_call.1} parent=5 // pred_check_branch
        %131 = sbr.rel (%p129) target = $region16
      $region15: #{tpu_custom_call.1} parent=5 // pred_region
        // Predicated region
        $region17: #{tpu_custom_call.1} parent=15 // pred_check
          %p132 = pneg %p51
        $region18: #{tpu_custom_call.1} parent=15 // pred_check_branch
          %134 = sbr.rel (%p132) target = $region20
        $region19: #{tpu_custom_call.1} parent=15 // pred_region
          %s135 = sand.u32 %s41, 1
          %s136 = scalar_lea.sflag [#allocation3], %s135
          %s137 = sand.u32 %s41, 1
          %s138 = smul.addr %s137, 16
          %s139 = scalar_lea.vmem [#allocation2], %s138
          %s140 = smul.u32 16, %s25
          %s141 = ssub.s32 29, %s140
          %p142 = scmp.lt.s32.totalorder %s141, 16
          %s143 = scalar_select %p142, %s141, 16
          %s144 = ssub.s32 16, %s143
          %s145 = sshll.u32 %s144, 4
          %146 = vsyncadd %s136, %s145
          %p147 = scmp.ne.s32.totalorder 0, %s143
          %s148 = smul.addr %s24, 29
          %s149 = sadd.s32 %s140, %s148
          %s150 = scalar_lea.hbm %s0, %s149
          %s151 = sshll.u32 %s143, 4
          %s152 = sshll.u32 %s150, 4
          %s153 = int_to_ptr.hbm [resolvable:$true] %s152
          %s154 = sshll.u32 %s139, 4
          %s155 = int_to_ptr.vmem [resolvable:$true] %s154
          %157 = dma.hbm_to_vmem [thread:$0]  (%p147), %s153, %s151, %s155, %s136
        $region20: #{tpu_custom_call.1} parent=15 // pred_fallthru
          _
        // Predicated region
        $region21: #{tpu_custom_call.1} parent=15 // pred_check
          %p158 = pneg %p79
        $region22: #{tpu_custom_call.1} parent=15 // pred_check_branch
          %160 = sbr.rel (%p158) target = $region24
        $region23: #{tpu_custom_call.1} parent=15 // pred_region
          %s161 = sand.u32 %s69, 1
          %s162 = scalar_lea.sflag [#allocation6], %s161
          %s163 = sand.u32 %s69, 1
          %s164 = smul.addr %s163, 16
          %s165 = scalar_lea.vmem [#allocation5], %s164
          %s166 = smul.u32 16, %s25
          %s167 = ssub.s32 29, %s166
          %p168 = scmp.lt.s32.totalorder %s167, 16
          %s169 = scalar_select %p168, %s167, 16
          %s170 = ssub.s32 16, %s169
          %s171 = sshll.u32 %s170, 4
          %172 = vsyncadd %s162, %s171
          %p173 = scmp.ne.s32.totalorder 0, %s169
          %s174 = smul.addr %s24, 29
          %s175 = sadd.s32 %s166, %s174
          %s176 = scalar_lea.hbm %s1, %s175
          %s177 = sshll.u32 %s169, 4
          %s178 = sshll.u32 %s176, 4
          %s179 = int_to_ptr.hbm [resolvable:$true] %s178
          %s180 = sshll.u32 %s165, 4
          %s181 = int_to_ptr.vmem [resolvable:$true] %s180
          %183 = dma.hbm_to_vmem [thread:$0]  (%p173), %s179, %s177, %s181, %s162
        $region24: #{tpu_custom_call.1} parent=15 // pred_fallthru
          _
      $region16: #{tpu_custom_call.1} parent=5 // pred_fallthru
        _
      %p184 = scmp.le.s32.totalorder 1, %s17
      %p185 = scmp.lt.s32.totalorder %s17, 3
      %p186 = pnand %p184, %p185
      %p187 = pneg %p186
      // Predicated region
      $region25: #{tpu_custom_call.1} parent=5 // pred_check
        _
      $region26: #{tpu_custom_call.1} parent=5 // pred_check_branch
        %189 = sbr.rel (%p186) target = $region28
      $region27: #{tpu_custom_call.1} parent=5 // pred_region
        %s190 = ssub.s32 %s17, 1
        %s191 = sand.u32 %s44, 1
        %s192 = scalar_lea.sflag [#allocation3], %s191
        %s193 = sand.u32 %s44, 1
        %s194 = smul.addr %s193, 16
        %s195 = scalar_lea.vmem [#allocation2], %s194
        // Predicated region
        $region29: #{tpu_custom_call.1} parent=27 // pred_check
          %p196 = pneg %p57
        $region30: #{tpu_custom_call.1} parent=27 // pred_check_branch
          %198 = sbr.rel (%p196) target = $region32
        $region31: #{tpu_custom_call.1} parent=27 // pred_region
          %200 = dma.done %s192, 256
        $region32: #{tpu_custom_call.1} parent=27 // pred_fallthru
          _
        %s201 = sand.u32 %s72, 1
        %s202 = scalar_lea.sflag [#allocation6], %s201
        %s203 = sand.u32 %s72, 1
        %s204 = smul.addr %s203, 16
        %s205 = scalar_lea.vmem [#allocation5], %s204
        // Predicated region
        $region33: #{tpu_custom_call.1} parent=27 // pred_check
          %p206 = pneg %p85
        $region34: #{tpu_custom_call.1} parent=27 // pred_check_branch
          %208 = sbr.rel (%p206) target = $region36
        $region35: #{tpu_custom_call.1} parent=27 // pred_region
          %210 = dma.done %s202, 256
        $region36: #{tpu_custom_call.1} parent=27 // pred_fallthru
          _
        %s211 = sand.u32 %s44, 1
        %s212 = scalar_lea.sflag [#allocation3], %s211
        %s213 = sand.u32 %s44, 1
        %s214 = smul.addr %s213, 16
        %s215 = scalar_lea.vmem [#allocation2], %s214
        %p216 = pneg %p57
        %p217 = pneg %p54
        %s218 = sand.u32 %s72, 1
        %s219 = scalar_lea.sflag [#allocation6], %s218
        %s220 = sand.u32 %s72, 1
        %s221 = smul.addr %s220, 16
        %s222 = scalar_lea.vmem [#allocation5], %s221
        %p223 = pneg %p85
        %p224 = pneg %p82
        %p225 = pneg %p113
        %p226 = pneg %p110
        %s227 = sand.u32 %s100, 1
        %s228 = scalar_lea.sflag [#allocation4], %s227
        %s229 = sand.u32 %s100, 1
        %s230 = smul.addr %s229, 16
        %s231 = scalar_lea.vmem [#allocation7], %s230
        %s232 = smul.u32 16, %s27
        %s233 = ssub.s32 29, %s232
        %p234 = scmp.lt.s32.totalorder %s233, 16
        %s235 = scalar_select %p234, %s233, 16
        %s236 = smul.u32 16, %s27
        %s237 = ssub.s32 29, %s236
        %p238 = scmp.lt.s32.totalorder %s237, 16
        %s239 = scalar_select %p238, %s237, 16
        %s240 = smul.u32 16, %s27
        %s241 = ssub.s32 29, %s240
        %p242 = scmp.lt.s32.totalorder %s241, 16
        %s243 = scalar_select %p242, %s241, 16
        %v244 = vld [vmem:[%s195] sm:$0xff]
        %v245 = vld [vmem:[%s195 + $0x8] sm:$0xff]
        %v246 = vld [vmem:[%s205] sm:$0xff]
        %v247 = vld [vmem:[%s205 + $0x8] sm:$0xff]
        %v248 = vand.u32 2147483647, %v244
        %v249 = vand.u32 2147483647, %v245
        %v250 = vsub.f32 0.0, %v248
        %v251 = vsub.f32 0.0, %v249
        %v252 = vmul.f32 %v250, 1.442695
        %v253 = vpow.pop %v252
        %v254 = vmul.f32 %v251, 1.442695
        %v255 = vpow.pop %v254
        %v256 = vadd.f32 %v253, 1.0
        %v257 = vlog2.pop %v256
        %v258 = vmul.f32 %v257, 0.6931472
        %v259 = vmul.f32 -0.5, %v253
        %v260 = vadd.f32 %v259, 1.0
        %v261 = vmul.f32 %v260, %v253
        %v262 = vand.u32 2147483647, %v253
        %vm263 = vcmp.lt.f32.partialorder %v262, 0.0004427343
        %v264 = vsel %vm263, %v261, %v258
        %v265 = vadd.f32 %v255, 1.0
        %v266 = vlog2.pop %v265
        %v267 = vmul.f32 %v266, 0.6931472
        %v268 = vmul.f32 -0.5, %v255
        %v269 = vadd.f32 %v268, 1.0
        %v270 = vmul.f32 %v269, %v255
        %v271 = vand.u32 2147483647, %v255
        %vm272 = vcmp.lt.f32.partialorder %v271, 0.0004427343
        %v273 = vsel %vm272, %v270, %v267
        %v274 = vmul.f32 %v246, 2.0
        %v275 = vmul.f32 %v247, 2.0
        %v276 = vsub.f32 1.0, %v274
        %v277 = vsub.f32 1.0, %v275
        %v278 = vmul.f32 %v276, %v244
        %v279 = vmul.f32 %v277, %v245
        %v280 = vmax.f32 %v278, 0.0
        %v281 = vmax.f32 %v279, 0.0
        %v282 = vadd.f32 %v280, %v264
        %v283 = vadd.f32 %v281, %v273
        %v284 = vadd.f32 %v253, 1.0
        %v285 = vadd.f32 %v255, 1.0
        %v286 = vrcp.pop %v284
        %v287 = vrcp.pop %v285
        %v288 = vmul.f32 %v284, %v286
        %v289 = vmul.f32 %v285, %v287
        %v290 = vsub.f32 2.0, %v288
        %v291 = vsub.f32 2.0, %v289
        %v292 = vmul.f32 %v286, %v290
        %v293 = vmul.f32 %v287, %v291
        %vm294 = vcmp.le.f32.partialorder %v278, 0.0
        %vm295 = vcmp.le.f32.partialorder %v279, 0.0
        %v296 = vsel %vm294, 1.0, %v253
        %v297 = vsel %vm295, 1.0, %v255
        %v298 = vmul.f32 %v292, %v296
        %v299 = vmul.f32 %v293, %v297
        %v300 = vsub.f32 1.0, %v298
        %v301 = vsub.f32 1.0, %v299
        %v302 = vmul.f32 %v300, %v300
        %v303 = vmul.f32 %v301, %v301
        %v304 = vmul.f32 %v302, %v300
        %v305 = vmul.f32 %v303, %v301
        %v306 = vmul.f32 %v304, 0.25
        %v307 = vmul.f32 %v305, 0.25
        %v308 = vmul.f32 %v306, %v282
        %v309 = vmul.f32 %v307, %v283
        %310 = vst [vmem:[%s231] sm:$0xff] %v308
        %311 = vst [vmem:[%s231 + $0x8] sm:$0xff] %v309
        %s312 = sand.u32 %s100, 1
        %s313 = scalar_lea.sflag [#allocation4], %s312
        %s314 = sand.u32 %s100, 1
        %s315 = smul.addr %s314, 16
        %s316 = scalar_lea.vmem [#allocation7], %s315
        // Predicated region
        $region37: #{tpu_custom_call.1} parent=27 // pred_check
          %p317 = pneg %p110
        $region38: #{tpu_custom_call.1} parent=27 // pred_check_branch
          %319 = sbr.rel (%p317) target = $region40
        $region39: #{tpu_custom_call.1} parent=27 // pred_region
          %s320 = smul.u32 16, %s27
          %s321 = ssub.s32 29, %s320
          %p322 = scmp.lt.s32.totalorder %s321, 16
          %s323 = scalar_select %p322, %s321, 16
          %s324 = ssub.s32 16, %s323
          %s325 = sshll.u32 %s324, 4
          %326 = vsyncadd %s313, %s325
          %p327 = scmp.ne.s32.totalorder 0, %s323
          %s328 = smul.addr %s26, 29
          %s329 = sadd.s32 %s320, %s328
          %s330 = scalar_lea.hbm %s2, %s329
          %s331 = sshll.u32 %s323, 4
          %s332 = sshll.u32 %s316, 4
          %s333 = int_to_ptr.vmem [resolvable:$true] %s332
          %s334 = sshll.u32 %s330, 4
          %s335 = int_to_ptr.hbm [resolvable:$true] %s334
          %337 = dma.vmem_to_hbm [thread:$0]  (%p327), %s333, %s331, %s335, %s313
        $region40: #{tpu_custom_call.1} parent=27 // pred_fallthru
          _
      $region28: #{tpu_custom_call.1} parent=5 // pred_fallthru
        _
      %p338 = scmp.le.s32.totalorder 2, %s17
      // Predicated region
      $region41: #{tpu_custom_call.1} parent=5 // pred_check
        %p339 = pneg %p338
      $region42: #{tpu_custom_call.1} parent=5 // pred_check_branch
        %341 = sbr.rel (%p339) target = $region44
      $region43: #{tpu_custom_call.1} parent=5 // pred_region
        %s342 = ssub.s32 %s17, 2
        // Predicated region
        $region45: #{tpu_custom_call.1} parent=43 // pred_check
          %p343 = pneg %p116
        $region46: #{tpu_custom_call.1} parent=43 // pred_check_branch
          %345 = sbr.rel (%p343) target = $region48
        $region47: #{tpu_custom_call.1} parent=43 // pred_region
          %s346 = sand.u32 %s101, 1
          %s347 = scalar_lea.sflag [#allocation4], %s346
          %s348 = sand.u32 %s101, 1
          %s349 = smul.addr %s348, 16
          %s350 = scalar_lea.vmem [#allocation7], %s349
          %352 = dma.done %s347, 256
        $region48: #{tpu_custom_call.1} parent=43 // pred_fallthru
          _
      $region44: #{tpu_custom_call.1} parent=5 // pred_fallthru
        _
    $region6: #{tpu_custom_call.1} parent=1 // loop_footer
      %s21 = sadd.s32 1, %s17
    $region7: #{tpu_custom_call.1} parent=1 // loop_footer_branch
      %16 = sbr.rel target = $region3
    $region8: #{tpu_custom_call.1} parent=1 // loop_exit
      _
    %353 = vsyncpa [#allocation3], 1
    %s354 = scalar_lea.sflag [#allocation3], 1
    %355 = vsyncpa %s354, 1
    %356 = vsyncpa [#allocation6], 1
    %s357 = scalar_lea.sflag [#allocation6], 1
    %358 = vsyncpa %s357, 1
    %359 = vsyncpa [#allocation4], 1
    %s360 = scalar_lea.sflag [#allocation4], 1
    %361 = vsyncpa %s360, 1

</llo_original>
